<compile_context>
chip_gen: v5e
topology: v5e:2x2
jax: 0.10.0
libtpu: 0.0.40
codegen_flags: <defaults>
</compile_context>

<pallas_src>
import jax
import jax.numpy as jnp
from jax.experimental import pallas as pl
from jax.experimental.pallas import tpu as pltpu


# Below this many bytes of total data, a standalone kernel is pure launch
# overhead -> use jnp.concatenate (which also fuses into the consumer).
_PALLAS_MIN_BYTES = 1 << 20  # 1 MiB


def _make_concat_kernel(n_inputs):
    """Kernel: load each input tile, concatenate in-register along lanes,
    write the output tile with a single full-width store."""

    def kernel(*refs):
        out_ref = refs[n_inputs]
        parts = [refs[i][...] for i in range(n_inputs)]
        if n_inputs == 1:
            out_ref[...] = parts[0]
        else:
            out_ref[...] = jnp.concatenate(parts, axis=-1)

    return kernel


def _choose_tile_rows(batch, total, itemsize):
    """Pick a batch-tile size that keeps double-buffered inputs+output under a
    conservative VMEM budget (fits v7x's 64 MiB VMEM with headroom)."""
    budget = 32 * 1024 * 1024  # bytes, total for 2x(inputs + output) buffers
    # double-buffered: 2 * (sum_i TB*d_i + TB*total) * itemsize = 4*TB*total*itemsize
    tb = budget // max(1, 4 * total * itemsize)
    tb = max(8, min(int(tb), 1024))
    # Sublane granularity depends on dtype packing: f32 -> 8, bf16 -> 16, int8 -> 32.
    sub = 8 * max(1, 4 // itemsize)
    tb = max(sub, (tb // sub) * sub)
    if batch <= tb:
        return batch  # single block covering the full batch (no tiling constraint)
    return tb


def pallas_concat_dim1(tensors, *, tile_rows=None):
    """Concatenate a list of [B, D_i] arrays along the last (feature) axis
    using a batch-tiled, pipelined Pallas kernel."""
    assert len(tensors) > 0
    tensors = [jnp.asarray(t) for t in tensors]
    B = tensors[0].shape[0]
    for t in tensors:
        assert t.ndim == 2 and t.shape[0] == B, "pallas path expects [B, D_i] inputs"

    # torch.cat-style dtype promotion.
    dtype = jnp.result_type(*tensors)
    tensors = [t.astype(dtype) for t in tensors]

    dims = [int(t.shape[1]) for t in tensors]
    total = sum(dims)
    itemsize = jnp.dtype(dtype).itemsize

    tb = tile_rows if tile_rows is not None else _choose_tile_rows(B, total, itemsize)
    tb = min(int(tb), B)
    if tb < B:
        sub = 8 * max(1, 4 // itemsize)
        tb = max(sub, (tb // sub) * sub)

    grid = (pl.cdiv(B, tb),)

    kernel = _make_concat_kernel(len(dims))

    in_specs = [pl.BlockSpec((tb, d), lambda i: (i, 0)) for d in dims]
    out_spec = pl.BlockSpec((tb, total), lambda i: (i, 0))

    # Double-buffered inputs + output, plus headroom; capped well under the
    # smallest physical VMEM (v7x: 64 MiB).
    needed = 4 * tb * total * itemsize
    vmem_limit = int(min(max(2 * needed + (2 << 20), 16 << 20), 48 << 20))

    return pl.pallas_call(
        kernel,
        out_shape=jax.ShapeDtypeStruct((B, total), dtype),
        grid=grid,
        in_specs=in_specs,
        out_specs=out_spec,
        compiler_params=pltpu.CompilerParams(
            dimension_semantics=("parallel",),
            vmem_limit_bytes=vmem_limit,
        ),
    )(*tensors)


class ConcatBlock:
    """JAX/Pallas port of the PyTorch ConcatBlock."""

    def __init__(self, endpoints, *, use_pallas=None, tile_rows=None):
        # use_pallas: True -> always Pallas, False -> always jnp.concatenate,
        #             None -> auto (size/rank gated).
        self.endpoints = list(endpoints)
        self.use_pallas = use_pallas
        self.tile_rows = tile_rows

    def calc_output_size(self, dimensions):
        return sum(dimensions[endpoint] for endpoint in self.endpoints)

    def __call__(self, outputs):
        # Python-side glue: flatten the endpoint dict exactly like forward().
        concat_list = []
        for endpoint in self.endpoints:
            emb = outputs[endpoint]
            if isinstance(emb, (list, tuple)):
                concat_list.extend(emb)
            else:
                concat_list.append(emb)

        concat_list = [jnp.asarray(t) for t in concat_list]
        all_2d = all(t.ndim == 2 for t in concat_list)
        total_bytes = sum(t.size * t.dtype.itemsize for t in concat_list)

        if self.use_pallas is True:
            take_pallas = True
        elif self.use_pallas is False:
            take_pallas = False
        else:
            take_pallas = all_2d and total_bytes >= _PALLAS_MIN_BYTES

        if take_pallas and all_2d:
            return pallas_concat_dim1(concat_list, tile_rows=self.tile_rows)
        # Small or non-2D inputs: plain concat (fuses into the consumer).
        return jnp.concatenate(concat_list, axis=1)


if __name__ == "__main__":
    key = jax.random.PRNGKey(0)
    k1, k2, k3 = jax.random.split(key, 3)

    B = 64
    # "backbone" maps to a list of two tensors to exercise the list branch.
    outputs = {
        "backbone": [
            jax.random.normal(k1, (B, 32), dtype=jnp.float32),
            jax.random.normal(k2, (B, 64), dtype=jnp.float32),
        ],
        "head": jax.random.normal(k3, (B, 128), dtype=jnp.float32),
    }

    ref = jnp.concatenate(
        [outputs["backbone"][0], outputs["backbone"][1], outputs["head"]], axis=1
    )

    # Force the Pallas path with a small row tile so the batch grid (and its
    # pipelining) is actually exercised at these small demo shapes.
    block = ConcatBlock(["backbone", "head"], use_pallas=True, tile_rows=16)
    out = jax.block_until_ready(block(outputs))
    assert out.shape == (B, 32 + 64 + 128), out.shape
    assert jnp.array_equal(out, ref), "mismatch vs reference concat (pallas path)"

    # Auto-gated path: at these tiny shapes it should dispatch to
    # jnp.concatenate and still match.
    auto_block = ConcatBlock(["backbone", "head"])
    out_auto = jax.block_until_ready(auto_block(outputs))
    assert jnp.array_equal(out_auto, ref), "mismatch vs reference concat (auto path)"

    print("KERNEL_OK")
</pallas_src>

<mosaic_0001>
module attributes {stable_mosaic.version = 11 : i64} {
  func.func @kernel(%arg0: i32, %arg1: memref<16x32xf32, #tpu.memory_space<vmem>>, %arg2: memref<16x64xf32, #tpu.memory_space<vmem>>, %arg3: memref<16x128xf32, #tpu.memory_space<vmem>>, %arg4: memref<16x224xf32, #tpu.memory_space<vmem>>) attributes {dimension_semantics = [#tpu.dimension_semantics<parallel>], iteration_bounds = array<i64: 4>, scalar_prefetch = 0 : i64, scratch_operands = 0 : i64, tpu.core_type = #tpu.core_type<tc>, window_params = [{transform_indices = @transform_0, window_bounds = array<i64: 16, 32>}, {transform_indices = @transform_1, window_bounds = array<i64: 16, 64>}, {transform_indices = @transform_2, window_bounds = array<i64: 16, 128>}, {transform_indices = @transform_3, window_bounds = array<i64: 16, 224>}]} {
    %c0 = arith.constant 0 : index
    %c0_0 = arith.constant 0 : index
    %0 = vector.load %arg1[%c0, %c0_0] : memref<16x32xf32, #tpu.memory_space<vmem>>, vector<16x32xf32>
    %c0_1 = arith.constant 0 : index
    %c0_2 = arith.constant 0 : index
    %1 = vector.load %arg2[%c0_1, %c0_2] : memref<16x64xf32, #tpu.memory_space<vmem>>, vector<16x64xf32>
    %c0_3 = arith.constant 0 : index
    %c0_4 = arith.constant 0 : index
    %2 = vector.load %arg3[%c0_3, %c0_4] : memref<16x128xf32, #tpu.memory_space<vmem>>, vector<16x128xf32>
    %3 = tpu.concatenate %0, %1, %2 in 1 : vector<16x32xf32>, vector<16x64xf32>, vector<16x128xf32> -> vector<16x224xf32>
    %c0_5 = arith.constant 0 : index
    %c0_6 = arith.constant 0 : index
    %4 = vector.load %arg4[%c0_5, %c0_6] : memref<16x224xf32, #tpu.memory_space<vmem>>, vector<16x224xf32>
    tpu.vector_store %arg4[%c0_5, %c0_6], %3 {strides = array<i32>} : memref<16x224xf32, #tpu.memory_space<vmem>>, vector<16x224xf32>,
    return
  }
  func.func @transform_0(%arg0: i32) -> (i32, i32) {
    %c0_i32 = arith.constant 0 : i32
    %c0_i32_0 = arith.constant 0 : i32
    return %arg0, %c0_i32 : i32, i32
  }
  func.func @transform_1(%arg0: i32) -> (i32, i32) {
    %c0_i32 = arith.constant 0 : i32
    %c0_i32_0 = arith.constant 0 : i32
    return %arg0, %c0_i32 : i32, i32
  }
  func.func @transform_2(%arg0: i32) -> (i32, i32) {
    %c0_i32 = arith.constant 0 : i32
    %c0_i32_0 = arith.constant 0 : i32
    return %arg0, %c0_i32 : i32, i32
  }
  func.func @transform_3(%arg0: i32) -> (i32, i32) {
    %c0_i32 = arith.constant 0 : i32
    %c0_i32_0 = arith.constant 0 : i32
    return %arg0, %c0_i32 : i32, i32
  }
}

</mosaic_0001>

<llo_original>
// kernel: tpu_custom_call.1
$region0: #{tpu_custom_call.1}
  #allocation0 [shape = 'u32[]', space=smem, size = 0x4, offset = 0x4, fixed_abs, tag = 'smem constant byte address 0x4 - core index']
  #allocation1 [shape = 'u32[72,128]{1,0:T(1,128)}', space=vmem, size = 0x9000, scoped, tag = 'internal scratch']
  %s0 = inlined_call_operand.vmem [shape: f32[64,32], index: 0, kind: input, shape index: {}]
  %s1 = inlined_call_operand.vmem [shape: f32[64,64], index: 1, kind: input, shape index: {}]
  %s2 = inlined_call_operand.hbm [shape: f32[64,128], index: 2, kind: input, shape index: {}]
  %s3 = inlined_call_operand.hbm [shape: f32[64,224], index: 3, kind: output, shape index: {}]
  %s4 = sld [smem:[#allocation0]]
  $region49: #{tpu_custom_call.1} parent=0
    _
  %s6 = ssub.s32 1, %s4
  %s7 = scalar_select 0, %s6, %s4
  $region1: #{tpu_custom_call.1} parent=0
    #allocation2 [shape = 'u8[16384]{0}', space=vmem, size = 0x4000, scoped, tag = 'input window, operand 2']
    #allocation3 [shape = 's32[2]{0}', space=sflag, size = 0x8, scoped, tag = 'scoped memory for tpu_custom_call.1']
    #allocation4 [shape = 's32[2]{0}', space=sflag, size = 0x8, scoped, tag = 'scoped memory for tpu_custom_call.1']
    #allocation5 [shape = 'u8[32768]{0}', space=vmem, size = 0x8000, scoped, tag = 'output window, operand 0']
    %8 = vsyncpa [#allocation3], 0
    %s9 = scalar_lea.sflag [#allocation3], 1
    %10 = vsyncpa %s9, 0
    %11 = vsyncpa [#allocation4], 0
    %s12 = scalar_lea.sflag [#allocation4], 1
    %13 = vsyncpa %s12, 0
    loop: start=0, step=1, limit=6
    $region2: #{tpu_custom_call.1} parent=1 // loop_pre_header
      _
    $region3: #{tpu_custom_call.1} parent=1 // loop_header
      %s15 = sphi 0, %s19
      %p16 = scmp.ge.s32.totalorder %s15, 6
      %s25 = sphi 0, %s27
      %s28 = sphi 0, %s25
      %s29 = sphi 0, %s28
      %s45 = sphi 0, %s29
      %s51 = sphi 0, %s53
      %s54 = sphi 0, %s51
      %s55 = sphi 0, %s54
      %s71 = sphi 0, %s55
      %s77 = sphi 0, %s79
      %s80 = sphi 0, %s77
      %s81 = sphi 0, %s80
      %s97 = sphi 0, %s81
      %s103 = sphi 0, %s105
      %s106 = sphi 0, %s103
      %s107 = sphi 0, %s106
      %s123 = sphi 0, %s107
    $region4: #{tpu_custom_call.1} parent=1 // loop_header_branch
      %18 = sbr.rel (%p16) target = $region8
    $region5: #{tpu_custom_call.1} parent=1 // loop_body
      %s20 = ssub.s32 %s15, 1
      %s21 = ssub.s32 %s15, 2
      %s22 = sadd.s32 %s15, 1
      %s23 = ssub.s32 %s15, %s22
      %p24 = scmp.eq.s32.totalorder %s23, 0
      %s26 = sadd.s32 %s25, 1
      %s27 = scalar_select %p24, %s25, %s26
      %p30 = pneg %p24
      %p31 = scmp.eq.s32.totalorder %s15, 3
      %p32 = por %p30, %p31
      %p33 = scmp.ne.s32.totalorder %s25, %s28
      %p34 = scmp.eq.s32.totalorder %s15, 0
      %p35 = por %p33, %p34
      %p36 = scmp.ne.s32.totalorder %s25, %s28
      %p37 = scmp.eq.s32.totalorder %s20, 3
      %p38 = por %p36, %p37
      %p39 = scmp.ne.s32.totalorder %s28, %s29
      %p40 = scmp.eq.s32.totalorder %s20, 0
      %p41 = por %p39, %p40
      %p42 = scmp.ne.s32.totalorder %s28, %s29
      %p43 = scmp.eq.s32.totalorder %s21, 3
      %p44 = por %p42, %p43
      %p46 = scmp.ne.s32.totalorder %s29, %s45
      %p47 = scmp.eq.s32.totalorder %s21, 0
      %p48 = por %p46, %p47
      %s49 = ssub.s32 %s15, %s22
      %p50 = scmp.eq.s32.totalorder %s49, 0
      %s52 = sadd.s32 %s51, 1
      %s53 = scalar_select %p50, %s51, %s52
      %p56 = pneg %p50
      %p57 = scmp.eq.s32.totalorder %s15, 3
      %p58 = por %p56, %p57
      %p59 = scmp.ne.s32.totalorder %s51, %s54
      %p60 = scmp.eq.s32.totalorder %s15, 0
      %p61 = por %p59, %p60
      %p62 = scmp.ne.s32.totalorder %s51, %s54
      %p63 = scmp.eq.s32.totalorder %s20, 3
      %p64 = por %p62, %p63
      %p65 = scmp.ne.s32.totalorder %s54, %s55
      %p66 = scmp.eq.s32.totalorder %s20, 0
      %p67 = por %p65, %p66
      %p68 = scmp.ne.s32.totalorder %s54, %s55
      %p69 = scmp.eq.s32.totalorder %s21, 3
      %p70 = por %p68, %p69
      %p72 = scmp.ne.s32.totalorder %s55, %s71
      %p73 = scmp.eq.s32.totalorder %s21, 0
      %p74 = por %p72, %p73
      %s75 = ssub.s32 %s15, %s22
      %p76 = scmp.eq.s32.totalorder %s75, 0
      %s78 = sadd.s32 %s77, 1
      %s79 = scalar_select %p76, %s77, %s78
      %p82 = pneg %p76
      %p83 = scmp.eq.s32.totalorder %s15, 3
      %p84 = por %p82, %p83
      %p85 = scmp.ne.s32.totalorder %s77, %s80
      %p86 = scmp.eq.s32.totalorder %s15, 0
      %p87 = por %p85, %p86
      %p88 = scmp.ne.s32.totalorder %s77, %s80
      %p89 = scmp.eq.s32.totalorder %s20, 3
      %p90 = por %p88, %p89
      %p91 = scmp.ne.s32.totalorder %s80, %s81
      %p92 = scmp.eq.s32.totalorder %s20, 0
      %p93 = por %p91, %p92
      %p94 = scmp.ne.s32.totalorder %s80, %s81
      %p95 = scmp.eq.s32.totalorder %s21, 3
      %p96 = por %p94, %p95
      %p98 = scmp.ne.s32.totalorder %s81, %s97
      %p99 = scmp.eq.s32.totalorder %s21, 0
      %p100 = por %p98, %p99
      %s101 = ssub.s32 %s15, %s22
      %p102 = scmp.eq.s32.totalorder %s101, 0
      %s104 = sadd.s32 %s103, 1
      %s105 = scalar_select %p102, %s103, %s104
      %p108 = pneg %p102
      %p109 = scmp.eq.s32.totalorder %s15, 3
      %p110 = por %p108, %p109
      %p111 = scmp.ne.s32.totalorder %s103, %s106
      %p112 = scmp.eq.s32.totalorder %s15, 0
      %p113 = por %p111, %p112
      %p114 = scmp.ne.s32.totalorder %s103, %s106
      %p115 = scmp.eq.s32.totalorder %s20, 3
      %p116 = por %p114, %p115
      %p117 = scmp.ne.s32.totalorder %s106, %s107
      %p118 = scmp.eq.s32.totalorder %s20, 0
      %p119 = por %p117, %p118
      %p120 = scmp.ne.s32.totalorder %s106, %s107
      %p121 = scmp.eq.s32.totalorder %s21, 3
      %p122 = por %p120, %p121
      %p124 = scmp.ne.s32.totalorder %s107, %s123
      %p125 = scmp.eq.s32.totalorder %s21, 0
      %p126 = por %p124, %p125
      %p127 = scmp.le.s32.totalorder 1, %s15
      %p128 = scmp.lt.s32.totalorder %s15, 5
      %p129 = pnand %p127, %p128
      %p130 = pneg %p129
      // Predicated region
      $region9: #{tpu_custom_call.1} parent=5 // pred_check
        _
      $region10: #{tpu_custom_call.1} parent=5 // pred_check_branch
        %132 = sbr.rel (%p129) target = $region12
      $region11: #{tpu_custom_call.1} parent=5 // pred_region
        %s133 = ssub.s32 %s15, 1
      $region12: #{tpu_custom_call.1} parent=5 // pred_fallthru
        _
      %p134 = scmp.lt.s32.totalorder %s15, 4
      // Predicated region
      $region13: #{tpu_custom_call.1} parent=5 // pred_check
        %p135 = pneg %p134
      $region14: #{tpu_custom_call.1} parent=5 // pred_check_branch
        %137 = sbr.rel (%p135) target = $region16
      $region15: #{tpu_custom_call.1} parent=5 // pred_region
        // Predicated region
        $region17: #{tpu_custom_call.1} parent=15 // pred_check
          %p138 = pneg %p35
        $region18: #{tpu_custom_call.1} parent=15 // pred_check_branch
          %140 = sbr.rel (%p138) target = $region20
        $region19: #{tpu_custom_call.1} parent=15 // pred_region
          %s141 = smul.u32 2, %s15
          %p142 = scmp.lt.s32.totalorder %s141, 7
          %s143 = scalar_select %p142, %s141, 7
          %s144 = smul.addr %s143, 8
          %s145 = scalar_lea.vmem %s0, %s144
          %s146 = smul.u32 2, %s15
        $region20: #{tpu_custom_call.1} parent=15 // pred_fallthru
          _
        // Predicated region
        $region21: #{tpu_custom_call.1} parent=15 // pred_check
          %p147 = pneg %p61
        $region22: #{tpu_custom_call.1} parent=15 // pred_check_branch
          %149 = sbr.rel (%p147) target = $region24
        $region23: #{tpu_custom_call.1} parent=15 // pred_region
          %s150 = smul.u32 2, %s15
          %p151 = scmp.lt.s32.totalorder %s150, 7
          %s152 = scalar_select %p151, %s150, 7
          %s153 = smul.addr %s152, 8
          %s154 = scalar_lea.vmem %s1, %s153
          %s155 = smul.u32 2, %s15
        $region24: #{tpu_custom_call.1} parent=15 // pred_fallthru
          _
        // Predicated region
        $region25: #{tpu_custom_call.1} parent=15 // pred_check
          %p156 = pneg %p87
        $region26: #{tpu_custom_call.1} parent=15 // pred_check_branch
          %158 = sbr.rel (%p156) target = $region28
        $region27: #{tpu_custom_call.1} parent=15 // pred_region
          %s159 = sand.u32 %s77, 1
          %s160 = scalar_lea.sflag [#allocation3], %s159
          %s161 = sand.u32 %s77, 1
          %s162 = smul.addr %s161, 16
          %s163 = scalar_lea.vmem [#allocation2], %s162
          %s164 = smul.u32 2, %s15
          %166 = vsyncadd %s160, 0
          %s167 = smul.addr %s164, 8
          %s168 = scalar_lea.hbm %s2, %s167
          %s169 = sshll.u32 %s168, 4
          %s170 = int_to_ptr.hbm [resolvable:$true] %s169
          %s171 = sshll.u32 %s163, 4
          %s172 = int_to_ptr.vmem [resolvable:$true] %s171
          %177 = dma.hbm_to_vmem [thread:$0]  %s170, 256, %s172, %s160, 128, 128, 8
        $region28: #{tpu_custom_call.1} parent=15 // pred_fallthru
          _
      $region16: #{tpu_custom_call.1} parent=5 // pred_fallthru
        _
      %p178 = scmp.le.s32.totalorder 1, %s15
      %p179 = scmp.lt.s32.totalorder %s15, 5
      %p180 = pnand %p178, %p179
      %p181 = pneg %p180
      // Predicated region
      $region29: #{tpu_custom_call.1} parent=5 // pred_check
        _
      $region30: #{tpu_custom_call.1} parent=5 // pred_check_branch
        %183 = sbr.rel (%p180) target = $region32
      $region31: #{tpu_custom_call.1} parent=5 // pred_region
        %s184 = ssub.s32 %s15, 1
        %s185 = sand.u32 %s80, 1
        %s186 = scalar_lea.sflag [#allocation3], %s185
        %s187 = sand.u32 %s80, 1
        %s188 = smul.addr %s187, 16
        %s189 = scalar_lea.vmem [#allocation2], %s188
        // Predicated region
        $region33: #{tpu_custom_call.1} parent=31 // pred_check
          %p190 = pneg %p93
        $region34: #{tpu_custom_call.1} parent=31 // pred_check_branch
          %192 = sbr.rel (%p190) target = $region36
        $region35: #{tpu_custom_call.1} parent=31 // pred_region
          %194 = dma.done %s186, 256
        $region36: #{tpu_custom_call.1} parent=31 // pred_fallthru
          _
        %s195 = smul.u32 2, %s20
        %p196 = scmp.lt.s32.totalorder %s195, 7
        %s197 = scalar_select %p196, %s195, 7
        %s198 = smul.addr %s197, 8
        %s199 = scalar_lea.vmem %s0, %s198
        %p200 = pneg %p41
        %p201 = pneg %p38
        %s202 = smul.u32 2, %s20
        %p203 = scmp.lt.s32.totalorder %s202, 7
        %s204 = scalar_select %p203, %s202, 7
        %s205 = smul.addr %s204, 8
        %s206 = scalar_lea.vmem %s1, %s205
        %p207 = pneg %p67
        %p208 = pneg %p64
        %s209 = sand.u32 %s80, 1
        %s210 = scalar_lea.sflag [#allocation3], %s209
        %s211 = sand.u32 %s80, 1
        %s212 = smul.addr %s211, 16
        %s213 = scalar_lea.vmem [#allocation2], %s212
        %p214 = pneg %p93
        %p215 = pneg %p90
        %p216 = pneg %p119
        %p217 = pneg %p116
        %s218 = sand.u32 %s106, 1
        %s219 = scalar_lea.sflag [#allocation4], %s218
        %s220 = sand.u32 %s106, 1
        %s221 = smul.addr %s220, 32
        %s222 = scalar_lea.vmem [#allocation5], %s221
        %s223 = smul.u32 2, %s20
        %p224 = scmp.lt.s32.totalorder %s223, 7
        %s225 = scalar_select %p224, %s223, 7
        %s226 = smul.addr %s225, 8
        %s227 = scalar_lea.vmem %s0, %s226
        %s228 = smul.u32 2, %s20
        %s229 = smul.u32 2, %s20
        %p230 = scmp.lt.s32.totalorder %s229, 7
        %s231 = scalar_select %p230, %s229, 7
        %s232 = smul.addr %s231, 8
        %s233 = scalar_lea.vmem %s1, %s232
        %s234 = smul.u32 2, %s20
        %s235 = smul.u32 2, %s20
        %s236 = smul.u32 2, %s20
        %v237 = vld [vmem:[%s227] sm:$0xff]
        %v238 = vld [vmem:[%s227 + $0x8] sm:$0xff]
        %v239 = vld [vmem:[%s233] sm:$0xff]
        %v240 = vld [vmem:[%s233 + $0x8] sm:$0xff]
        %v241 = vld [vmem:[%s189] sm:$0xff]
        %v242 = vld [vmem:[%s189 + $0x8] sm:$0xff]
        %245 = vrot.lane.b32.xlu0 %v239, 32
        %v246 = vpop.permute.xlu0 %245
        %247 = vrot.lane.b32.xlu0 %v240, 32
        %v248 = vpop.permute.xlu0 %247
        %253 = vrot.lane.b32.xlu0 %v241, 96
        %v254 = vpop.permute.xlu0 %253
        %255 = vrot.lane.b32.xlu0 %v242, 96
        %v256 = vpop.permute.xlu0 %255
        %vm259 = vcmask 261120
        %v260 = vsel %vm259, %v237, %v246
        %v261 = vsel %vm259, %v238, %v248
        %vm262 = vcmask 785408
        %v263 = vsel %vm262, %v260, %v254
        %v264 = vsel %vm262, %v261, %v256
        %265 = vst [vmem:[%s222] sm:$0xff] %v263
        %266 = vst.msk [vmem:[%s222 + $0x8] sm:$0xff] %vm262, %v254
        %267 = vst [vmem:[%s222 + $0x10] sm:$0xff] %v264
        %268 = vst.msk [vmem:[%s222 + $0x18] sm:$0xff] %vm262, %v256
        %s269 = sand.u32 %s106, 1
        %s270 = scalar_lea.sflag [#allocation4], %s269
        %s271 = sand.u32 %s106, 1
        %s272 = smul.addr %s271, 32
        %s273 = scalar_lea.vmem [#allocation5], %s272
        // Predicated region
        $region37: #{tpu_custom_call.1} parent=31 // pred_check
          %p274 = pneg %p116
        $region38: #{tpu_custom_call.1} parent=31 // pred_check_branch
          %276 = sbr.rel (%p274) target = $region40
        $region39: #{tpu_custom_call.1} parent=31 // pred_region
          %s277 = smul.u32 2, %s20
          %279 = vsyncadd %s270, 0
          %s280 = smul.addr %s277, 2
          %s281 = smul.addr %s280, 8
          %s282 = scalar_lea.hbm %s3, %s281
          %s283 = sshll.u32 %s273, 4
          %s284 = int_to_ptr.vmem [resolvable:$true] %s283
          %s285 = sshll.u32 %s282, 4
          %s286 = int_to_ptr.hbm [resolvable:$true] %s285
          %291 = dma.vmem_to_hbm [thread:$0]  %s284, 512, %s286, %s270, 256, 256, 16
        $region40: #{tpu_custom_call.1} parent=31 // pred_fallthru
          _
      $region32: #{tpu_custom_call.1} parent=5 // pred_fallthru
        _
      %p292 = scmp.le.s32.totalorder 2, %s15
      // Predicated region
      $region41: #{tpu_custom_call.1} parent=5 // pred_check
        %p293 = pneg %p292
      $region42: #{tpu_custom_call.1} parent=5 // pred_check_branch
        %295 = sbr.rel (%p293) target = $region44
      $region43: #{tpu_custom_call.1} parent=5 // pred_region
        %s296 = ssub.s32 %s15, 2
        // Predicated region
        $region45: #{tpu_custom_call.1} parent=43 // pred_check
          %p297 = pneg %p122
        $region46: #{tpu_custom_call.1} parent=43 // pred_check_branch
          %299 = sbr.rel (%p297) target = $region48
        $region47: #{tpu_custom_call.1} parent=43 // pred_region
          %s300 = sand.u32 %s107, 1
          %s301 = scalar_lea.sflag [#allocation4], %s300
          %s302 = sand.u32 %s107, 1
          %s303 = smul.addr %s302, 32
          %s304 = scalar_lea.vmem [#allocation5], %s303
          %306 = dma.done %s301, 512
        $region48: #{tpu_custom_call.1} parent=43 // pred_fallthru
          _
      $region44: #{tpu_custom_call.1} parent=5 // pred_fallthru
        _
    $region6: #{tpu_custom_call.1} parent=1 // loop_footer
      %s19 = sadd.s32 1, %s15
    $region7: #{tpu_custom_call.1} parent=1 // loop_footer_branch
      %14 = sbr.rel target = $region3
    $region8: #{tpu_custom_call.1} parent=1 // loop_exit
      _
    %307 = vsyncpa [#allocation3], 1
    %s308 = scalar_lea.sflag [#allocation3], 1
    %309 = vsyncpa %s308, 1
    %310 = vsyncpa [#allocation4], 1
    %s311 = scalar_lea.sflag [#allocation4], 1
    %312 = vsyncpa %s311, 1

</llo_original>
